<compile_context>
chip_gen: v6e
topology: v6e:2x2x1
jax: 0.10.0
libtpu: 0.0.40
codegen_flags: <defaults>
</compile_context>

<pallas_src>
import functools
import math

import jax
import jax.numpy as jnp
from jax.experimental import pallas as pl
from jax.experimental.pallas import tpu as pltpu


def _round_up(x, m):
    return ((x + m - 1) // m) * m


def _vmem_capacity_bytes():
    try:
        return int(pltpu.get_tpu_info().vmem_capacity_bytes)
    except Exception:
        return 64 * 1024 * 1024  # v7x per-TC capacity; safe floor everywhere


def _fc_kernel_multi_k(x_ref, w_ref, b_ref, o_ref, acc_ref, *, activation,
                       negative_slope):
    # x_ref: (tm, tk)  w_ref: (tk, tn) [pre-transposed (K,N) layout]
    # b_ref: (1, tn)   o_ref: (tm, tn)  acc_ref: (tm, tn) f32
    k = pl.program_id(2)
    partial = jnp.dot(x_ref[...], w_ref[...], preferred_element_type=jnp.float32)

    @pl.when(k == 0)
    def _():
        acc_ref[...] = partial          # first K step: write, no zero-init pass

    @pl.when(k > 0)
    def _():
        acc_ref[...] += partial

    @pl.when(k == pl.num_programs(2) - 1)
    def _():
        y = acc_ref[...] + b_ref[...].astype(jnp.float32)
        if activation:
            # torch.nn.LeakyReLU(negative_slope)
            y = jnp.where(y >= 0, y, negative_slope * y)
        o_ref[...] = y.astype(o_ref.dtype)


def _fc_kernel_single_k(x_ref, w_ref, b_ref, o_ref, *, activation,
                        negative_slope):
    # Whole reduction in one step: no VMEM accumulator round-trip.
    y = jnp.dot(x_ref[...], w_ref[...], preferred_element_type=jnp.float32)
    y = y + b_ref[...].astype(jnp.float32)
    if activation:
        y = jnp.where(y >= 0, y, negative_slope * y)
    o_ref[...] = y.astype(o_ref.dtype)


def _make_weight_spec(tile_k, tile_n, deep):
    # Deeper buffering for the streaming weight operand when there are
    # enough K steps; fall back cleanly if pipeline_mode is unavailable.
    if deep:
        try:
            return pl.BlockSpec((tile_k, tile_n), lambda i, j, k: (k, j),
                                pipeline_mode=pl.Buffered(3))
        except TypeError:
            pass
    return pl.BlockSpec((tile_k, tile_n), lambda i, j, k: (k, j))


class FcLayerKernel:
    """Pallas TPU FcLayer: y = [LeakyReLU](x @ W.T + b).

    Weight/bias prep (transpose to (K,N), pad, cast) happens ONCE here, at
    "model load" time, so per-call work is just the kernel plus a cheap
    K-padding of the activations.
    """

    def __init__(self, weight, bias, *, activation=True, negative_slope=0.01,
                 tile_m=512, tile_n=256, tile_k=1024,
                 compute_dtype=None, out_dtype=None):
        N, K = weight.shape
        assert bias.shape == (N,)
        self.K, self.N = K, N
        self.activation = bool(activation)
        self.negative_slope = float(negative_slope)
        self.out_dtype = out_dtype

        w_dtype = compute_dtype if compute_dtype is not None else weight.dtype
        itemsize = jnp.dtype(w_dtype).itemsize
        # bf16 packs 16 rows / int8-fp8 pack 32 rows per sublane group.
        self._min_m = {4: 8, 2: 16, 1: 32}.get(itemsize, 8)

        # tile_n / tile_k: multiples of 128, clamped to the padded problem.
        self.tile_n = min(_round_up(tile_n, 128), _round_up(N, 128))
        self.tile_k = min(_round_up(tile_k, 128), _round_up(K, 128))
        self.tile_m_req = max(int(tile_m), self._min_m)
        self.Np = _round_up(N, self.tile_n)   # lane-dense output / weight cols
        self.Kp = _round_up(K, self.tile_k)   # exact reduction (zero K tail)

        # One-time prep: (N,K) -> (K,N), cast, zero-pad to (Kp, Np).
        w_kn = jnp.transpose(weight).astype(w_dtype)
        self.w_kn = jnp.pad(w_kn, ((0, self.Kp - K), (0, self.Np - N)))
        self.b2d = jnp.pad(bias.astype(jnp.float32),
                           (0, self.Np - N)).reshape(1, self.Np)

    def __call__(self, x):
        M, K = x.shape
        assert K == self.K
        out_dtype = self.out_dtype or x.dtype

        if x.dtype != self.w_kn.dtype:
            x = x.astype(self.w_kn.dtype)
        if self.Kp != K:
            x = jnp.pad(x, ((0, 0), (0, self.Kp - K)))  # cheap: activations only

        tile_m = max(self._min_m,
                     min(_round_up(self.tile_m_req, self._min_m),
                         _round_up(M, self._min_m)))
        tile_n, tile_k = self.tile_n, self.tile_k
        Mt = pl.cdiv(M, tile_m)
        Nt = self.Np // tile_n
        Kt = self.Kp // tile_k

        # v7x has 2 TensorCores: ensure the parallel (M,N) grid has >=2 tiles
        # so megacore sharding can use both (harmless on 1-TC v5e/v6e).
        if Mt * Nt == 1 and tile_n % 256 == 0:
            tile_n //= 2
            Nt = self.Np // tile_n

        in_b = jnp.dtype(self.w_kn.dtype).itemsize
        out_b = jnp.dtype(out_dtype).itemsize
        kern_kwargs = dict(activation=self.activation,
                           negative_slope=self.negative_slope)

        if Kt == 1:
            # Single K step: no accumulator scratch, 2-D parallel grid.
            grid = (Mt, Nt)
            kernel = functools.partial(_fc_kernel_single_k, **kern_kwargs)
            in_specs = [
                pl.BlockSpec((tile_m, self.Kp), lambda i, j: (i, 0)),
                pl.BlockSpec((self.Kp, tile_n), lambda i, j: (0, j)),
                pl.BlockSpec((1, tile_n), lambda i, j: (0, j)),
            ]
            out_spec = pl.BlockSpec((tile_m, tile_n), lambda i, j: (i, j))
            scratch = []
            dims = ("parallel", "parallel")
            est = (2 * tile_m * self.Kp * in_b + 2 * self.Kp * tile_n * in_b
                   + 2 * tile_m * tile_n * out_b + 2 * tile_n * 4)
        else:
            grid = (Mt, Nt, Kt)
            kernel = functools.partial(_fc_kernel_multi_k, **kern_kwargs)
            deep = Kt >= 3
            in_specs = [
                pl.BlockSpec((tile_m, tile_k), lambda i, j, k: (i, k)),
                _make_weight_spec(tile_k, tile_n, deep),
                pl.BlockSpec((1, tile_n), lambda i, j, k: (0, j)),
            ]
            out_spec = pl.BlockSpec((tile_m, tile_n), lambda i, j, k: (i, j))
            scratch = [pltpu.VMEM((tile_m, tile_n), jnp.float32)]
            dims = ("parallel", "parallel", "arbitrary")
            wbufs = 3 if deep else 2
            est = (2 * tile_m * tile_k * in_b + wbufs * tile_k * tile_n * in_b
                   + 2 * tile_m * tile_n * out_b + 2 * tile_n * 4
                   + tile_m * tile_n * 4)

        # Generation-aware VMEM limit (v7x only has 64 MiB per TensorCore).
        vmem_limit = int(min(max(2 * est, 32 * 1024 * 1024),
                             int(0.85 * _vmem_capacity_bytes())))

        cost = pl.CostEstimate(
            flops=2 * M * self.Np * self.Kp,
            transcendentals=0,
            bytes_accessed=(M * self.Kp * in_b + self.Kp * self.Np * in_b
                            + M * self.Np * out_b),
        )

        # Note: a partial last M tile reads stale VMEM rows into the x block;
        # those rows only feed output rows that Pallas masks on store.
        out = pl.pallas_call(
            kernel,
            out_shape=jax.ShapeDtypeStruct((M, self.Np), out_dtype),
            grid_spec=pltpu.PrefetchScalarGridSpec(
                num_scalar_prefetch=0,
                grid=grid,
                in_specs=in_specs,
                out_specs=out_spec,
                scratch_shapes=scratch,
            ),
            compiler_params=pltpu.CompilerParams(
                dimension_semantics=dims,
                vmem_limit_bytes=vmem_limit,
            ),
            cost_estimate=cost,
        )(x, self.w_kn, self.b2d)

        if self.Np != self.N:
            out = out[:, :self.N]
        return out


def fc_layer(x, weight, bias, **kwargs):
    """One-shot convenience wrapper. For repeated calls, build FcLayerKernel
    once (weight prep is then amortized across calls)."""
    return FcLayerKernel(weight, bias, **kwargs)(x)


# TODO(synk): norm branch (e.g. nn.BatchNorm1d) and train-mode dropout are not
# implemented; FcLayer defaults use norm=False and dropout is identity at
# inference time.


def _leaky_ref(x, weight, bias, slope=0.01):
    y = x @ weight.T + bias
    return jnp.where(y >= 0, y, slope * y)


if __name__ == "__main__":
    key = jax.random.PRNGKey(0)

    # --- Test 1: small module-default shapes (f32, single-K fast path) ------
    k_x, k_w, k_b = jax.random.split(key, 3)
    batch, layer_in, layer_out = 8, 32, 64
    bound = 1.0 / math.sqrt(layer_in)
    x = jax.random.normal(k_x, (batch, layer_in), dtype=jnp.float32)
    weight = jax.random.uniform(k_w, (layer_out, layer_in),
                                minval=-bound, maxval=bound, dtype=jnp.float32)
    bias = jax.random.uniform(k_b, (layer_out,),
                              minval=-bound, maxval=bound, dtype=jnp.float32)

    layer1 = FcLayerKernel(weight, bias, activation=True)
    out = jax.block_until_ready(layer1(x))
    ref = _leaky_ref(x, weight, bias)
    assert out.shape == (batch, layer_out)
    assert jnp.allclose(out, ref, atol=1e-5), "mismatch vs reference (small f32)"

    # --- Test 2: multi-K grid + N/K padding + partial M tile (f32) ----------
    k_x2, k_w2, k_b2 = jax.random.split(jax.random.PRNGKey(1), 3)
    M2, K2, N2 = 300, 300, 192   # K pads 300->384 (3 K steps), N pads 192->256
    bound2 = 1.0 / math.sqrt(K2)
    x2 = jax.random.normal(k_x2, (M2, K2), dtype=jnp.float32)
    w2 = jax.random.uniform(k_w2, (N2, K2), minval=-bound2, maxval=bound2,
                            dtype=jnp.float32)
    b2 = jax.random.uniform(k_b2, (N2,), minval=-bound2, maxval=bound2,
                            dtype=jnp.float32)
    layer2 = FcLayerKernel(w2, b2, activation=True, tile_n=128, tile_k=128)
    out2 = jax.block_until_ready(layer2(x2))
    ref2 = _leaky_ref(x2, w2, b2)
    assert out2.shape == (M2, N2)
    assert jnp.allclose(out2, ref2, atol=2e-3, rtol=2e-3), "mismatch (tiled f32)"

    # --- Test 3: bf16 compute path (pre-cast weight, f32 MXU accumulation) --
    layer3 = FcLayerKernel(w2, b2, activation=True, tile_n=128, tile_k=128,
                           compute_dtype=jnp.bfloat16, out_dtype=jnp.float32)
    out3 = jax.block_until_ready(layer3(x2))
    assert out3.shape == (M2, N2)
    assert jnp.allclose(out3, ref2, atol=1e-1, rtol=1e-1), "mismatch (bf16)"

    print("KERNEL_OK")
</pallas_src>

<mosaic_0001>
module attributes {stable_mosaic.version = 11 : i64} {
  func.func @_fc_kernel_single_k(%arg0: i32, %arg1: i32, %arg2: memref<8x128xf32, #tpu.memory_space<vmem>>, %arg3: memref<128x128xf32, #tpu.memory_space<vmem>>, %arg4: memref<1x128xf32, #tpu.memory_space<vmem>>, %arg5: memref<8x128xf32, #tpu.memory_space<vmem>>) attributes {dimension_semantics = [#tpu.dimension_semantics<parallel>, #tpu.dimension_semantics<parallel>], iteration_bounds = array<i64: 1, 1>, scalar_prefetch = 0 : i64, scratch_operands = 0 : i64, tpu.core_type = #tpu.core_type<tc>, window_params = [{transform_indices = @transform_0, window_bounds = array<i64: 8, 128>}, {transform_indices = @transform_1, window_bounds = array<i64: 128, 128>}, {transform_indices = @transform_2, window_bounds = array<i64: 1, 128>}, {transform_indices = @transform_3, window_bounds = array<i64: 8, 128>}]} {
    %c0 = arith.constant 0 : index
    %c0_0 = arith.constant 0 : index
    %0 = vector.load %arg2[%c0, %c0_0] : memref<8x128xf32, #tpu.memory_space<vmem>>, vector<8x128xf32>
    %c0_1 = arith.constant 0 : index
    %c0_2 = arith.constant 0 : index
    %1 = vector.load %arg3[%c0_1, %c0_2] : memref<128x128xf32, #tpu.memory_space<vmem>>, vector<128x128xf32>
    %cst = arith.constant dense<0.000000e+00> : vector<8x128xf32>
    %2 = tpu.matmul %0, %1, %cst {dimension_numbers = #tpu.dot_dimension_numbers<[1], [0], [0], [1], [0, 0, 1, 1], [], []>} : vector<8x128xf32>, vector<128x128xf32>, vector<8x128xf32> -> vector<8x128xf32>
    %c0_3 = arith.constant 0 : index
    %c0_4 = arith.constant 0 : index
    %3 = vector.load %arg4[%c0_3, %c0_4] : memref<1x128xf32, #tpu.memory_space<vmem>>, vector<1x128xf32>
    %4 = vector.broadcast %3 : vector<1x128xf32> to vector<8x128xf32>
    %5 = arith.addf %2, %4 : vector<8x128xf32>
    %cst_5 = arith.constant 0.000000e+00 : f32
    %6 = vector.broadcast %cst_5 : f32 to vector<8x128xf32>
    %7 = arith.cmpf oge, %5, %6 : vector<8x128xf32>
    %cst_6 = arith.constant 0.00999999977 : f32
    %8 = vector.broadcast %cst_6 : f32 to vector<8x128xf32>
    %9 = arith.mulf %8, %5 : vector<8x128xf32>
    %10 = arith.select %7, %5, %9 : vector<8x128xi1>, vector<8x128xf32>
    %c0_7 = arith.constant 0 : index
    %c0_8 = arith.constant 0 : index
    %11 = vector.load %arg5[%c0_7, %c0_8] : memref<8x128xf32, #tpu.memory_space<vmem>>, vector<8x128xf32>
    tpu.vector_store %arg5[%c0_7, %c0_8], %10 {strides = array<i32>} : memref<8x128xf32, #tpu.memory_space<vmem>>, vector<8x128xf32>,
    return
  }
  func.func @transform_0(%arg0: i32, %arg1: i32) -> (i32, i32) {
    %c0_i32 = arith.constant 0 : i32
    %c0_i32_0 = arith.constant 0 : i32
    return %arg0, %c0_i32 : i32, i32
  }
  func.func @transform_1(%arg0: i32, %arg1: i32) -> (i32, i32) {
    %c0_i32 = arith.constant 0 : i32
    %c0_i32_0 = arith.constant 0 : i32
    return %c0_i32, %arg1 : i32, i32
  }
  func.func @transform_2(%arg0: i32, %arg1: i32) -> (i32, i32) {
    %c0_i32 = arith.constant 0 : i32
    %c0_i32_0 = arith.constant 0 : i32
    return %c0_i32, %arg1 : i32, i32
  }
  func.func @transform_3(%arg0: i32, %arg1: i32) -> (i32, i32) {
    %c0_i32 = arith.constant 0 : i32
    return %arg0, %arg1 : i32, i32
  }
}

</mosaic_0001>

<llo_original>
// kernel: tpu_custom_call.1
$region0: #{tpu_custom_call.1}
  #allocation0 [shape = 'u32[]', space=smem, size = 0x4, offset = 0x4, fixed_abs, tag = 'smem constant byte address 0x4 - core index']
  #allocation1 [shape = 'u32[144,128]{1,0:T(1,128)}', space=vmem, size = 0x12000, scoped, tag = 'internal scratch']
  %s0 = inlined_call_operand.hbm [shape: f32[8,128], index: 0, kind: input, shape index: {}]
  %s1 = inlined_call_operand.hbm [shape: f32[128,128], index: 1, kind: input, shape index: {}]
  %s2 = inlined_call_operand.vmem [shape: f32[1,128], index: 2, kind: input, shape index: {}]
  %s3 = inlined_call_operand.hbm [shape: f32[8,128], index: 3, kind: output, shape index: {}]
  %s4 = sld [smem:[#allocation0]]
  $region30: #{tpu_custom_call.1} parent=0
    _
  %s6 = ssub.s32 1, %s4
  %s7 = scalar_select 0, %s6, %s4
  $region1: #{tpu_custom_call.1} parent=0
    #allocation2 [shape = 'u8[4096]{0}', space=vmem, size = 0x1000, scoped, tag = 'input window, operand 0, single buffered']
    #allocation3 [shape = 's32[1]{0}', space=sflag, size = 0x4, scoped, tag = 'scoped memory for tpu_custom_call.1']
    #allocation4 [shape = 's32[1]{0}', space=sflag, size = 0x4, scoped, tag = 'scoped memory for tpu_custom_call.1']
    #allocation5 [shape = 'u8[65536]{0}', space=vmem, size = 0x10000, scoped, tag = 'input window, operand 1, single buffered']
    #allocation6 [shape = 's32[1]{0}', space=sflag, size = 0x4, scoped, tag = 'scoped memory for tpu_custom_call.1']
    #allocation7 [shape = 'u8[4096]{0}', space=vmem, size = 0x1000, scoped, tag = 'output window, operand 0, single buffered']
    %8 = vsyncpa [#allocation3], 0
    %9 = vsyncpa [#allocation6], 0
    %10 = vsyncpa [#allocation4], 0
    // Predicated region
    $region2: #{tpu_custom_call.1} parent=1 // pred_check
      _
    $region3: #{tpu_custom_call.1} parent=1 // pred_check_branch
      %12 = sbr.rel (0) target = $region5
    $region4: #{tpu_custom_call.1} parent=1 // pred_region
      %s14 = ssub.s32 128, 128
      %15 = vsyncadd [#allocation3], %s14
      %s17 = sshll.u32 [#allocation2], 4
      %s18 = int_to_ptr.vmem [resolvable:$true] %s17
      %20 = dma.hbm_to_vmem [thread:$0]  %s0, 128, %s18, [#allocation3]
    $region5: #{tpu_custom_call.1} parent=1 // pred_fallthru
      _
    // Predicated region
    $region6: #{tpu_custom_call.1} parent=1 // pred_check
      _
    $region7: #{tpu_custom_call.1} parent=1 // pred_check_branch
      %22 = sbr.rel (0) target = $region9
    $region8: #{tpu_custom_call.1} parent=1 // pred_region
      %s24 = ssub.s32 2048, 2048
      %25 = vsyncadd [#allocation6], %s24
      %s26 = sshll.u32 [#allocation5], 4
      %s27 = int_to_ptr.vmem [resolvable:$true] %s26
      %32 = dma.hbm_to_vmem [thread:$0]  %s1, 2048, %s27, [#allocation6], 128, 128, 8
    $region9: #{tpu_custom_call.1} parent=1 // pred_fallthru
      _
    // Predicated region
    $region10: #{tpu_custom_call.1} parent=1 // pred_check
      _
    $region11: #{tpu_custom_call.1} parent=1 // pred_check_branch
      %34 = sbr.rel (0) target = $region13
    $region12: #{tpu_custom_call.1} parent=1 // pred_region
      _
    $region13: #{tpu_custom_call.1} parent=1 // pred_fallthru
      _
    // Predicated region
    $region14: #{tpu_custom_call.1} parent=1 // pred_check
      _
    $region15: #{tpu_custom_call.1} parent=1 // pred_check_branch
      %36 = sbr.rel (0) target = $region17
    $region16: #{tpu_custom_call.1} parent=1 // pred_region
      %37 = dma.done [#allocation3], 128
    $region17: #{tpu_custom_call.1} parent=1 // pred_fallthru
      _
    // Predicated region
    $region18: #{tpu_custom_call.1} parent=1 // pred_check
      _
    $region19: #{tpu_custom_call.1} parent=1 // pred_check_branch
      %39 = sbr.rel (0) target = $region21
    $region20: #{tpu_custom_call.1} parent=1 // pred_region
      %40 = dma.done [#allocation6], 2048
    $region21: #{tpu_custom_call.1} parent=1 // pred_fallthru
      _
    %v41 = vld [vmem:[#allocation2] sm:$0xff]
    %v42 = vld [vmem:[#allocation5] sm:$0xff]
    %v43 = vld [vmem:[#allocation5 + $0x8] sm:$0xff]
    %v44 = vld [vmem:[#allocation5 + $0x10] sm:$0xff]
    %v45 = vld [vmem:[#allocation5 + $0x18] sm:$0xff]
    %v46 = vld [vmem:[#allocation5 + $0x20] sm:$0xff]
    %v47 = vld [vmem:[#allocation5 + $0x28] sm:$0xff]
    %v48 = vld [vmem:[#allocation5 + $0x30] sm:$0xff]
    %v49 = vld [vmem:[#allocation5 + $0x38] sm:$0xff]
    %v50 = vld [vmem:[#allocation5 + $0x40] sm:$0xff]
    %v51 = vld [vmem:[#allocation5 + $0x48] sm:$0xff]
    %v52 = vld [vmem:[#allocation5 + $0x50] sm:$0xff]
    %v53 = vld [vmem:[#allocation5 + $0x58] sm:$0xff]
    %v54 = vld [vmem:[#allocation5 + $0x60] sm:$0xff]
    %v55 = vld [vmem:[#allocation5 + $0x68] sm:$0xff]
    %v56 = vld [vmem:[#allocation5 + $0x70] sm:$0xff]
    %v57 = vld [vmem:[#allocation5 + $0x78] sm:$0xff]
    %v58 = vld [vmem:[%s2] sm:$0x1]
    %v60 = vlaneseq
    %v61 = vshrl.u32 %v60, 7
    %v62 = vsub.s32 0, %v61
    %v63 = vrot.slane %v58, %v62
    %65 = vmatprep.subr.mxu0 0.0
    %66 = vmatpush1.msra.mxu0 %v57
    %67 = vmatprep.subr.mxu0 0.0
    %68 = vmatpush1.msra.mxu0 %v56
    %69 = vmatprep.subr.mxu0 0.0
    %70 = vmatpush1.msra.mxu0 %v55
    %71 = vmatprep.subr.mxu0 0.0
    %72 = vmatpush1.msra.mxu0 %v54
    %73 = vmatprep.subr.mxu0 0.0
    %74 = vmatpush1.msra.mxu0 %v53
    %75 = vmatprep.subr.mxu0 0.0
    %76 = vmatpush1.msra.mxu0 %v52
    %77 = vmatprep.subr.mxu0 0.0
    %78 = vmatpush1.msra.mxu0 %v51
    %79 = vmatprep.subr.mxu0 0.0
    %80 = vmatpush1.msra.mxu0 %v50
    %81 = vmatprep.subr.mxu0 0.0
    %82 = vmatpush1.msra.mxu0 %v49
    %83 = vmatprep.subr.mxu0 0.0
    %84 = vmatpush1.msra.mxu0 %v48
    %85 = vmatprep.subr.mxu0 0.0
    %86 = vmatpush1.msra.mxu0 %v47
    %87 = vmatprep.subr.mxu0 0.0
    %88 = vmatpush1.msra.mxu0 %v46
    %89 = vmatprep.subr.mxu0 0.0
    %90 = vmatpush1.msra.mxu0 %v45
    %91 = vmatprep.subr.mxu0 0.0
    %92 = vmatpush1.msra.mxu0 %v44
    %93 = vmatprep.subr.mxu0 0.0
    %94 = vmatpush1.msra.mxu0 %v43
    %95 = vmatprep.subr.mxu0 0.0
    %96 = vmatpush1.msra.mxu0 %v42
    %97 = vmatprep.subr.mxu0 0.0
    %98 = vmatpush2.msra.mxu0 0.0
    %99 = vmatprep.subr.mxu0 0.0
    %100 = vmatpush2.msra.mxu0 0.0
    %101 = vmatprep.subr.mxu0 0.0
    %102 = vmatpush2.msra.mxu0 0.0
    %103 = vmatprep.subr.mxu0 0.0
    %104 = vmatpush2.msra.mxu0 0.0
    %105 = vmatprep.subr.mxu0 0.0
    %106 = vmatpush2.msra.mxu0 0.0
    %107 = vmatprep.subr.mxu0 0.0
    %108 = vmatpush2.msra.mxu0 0.0
    %109 = vmatprep.subr.mxu0 0.0
    %110 = vmatpush2.msra.mxu0 0.0
    %111 = vmatprep.subr.mxu0 0.0
    %112 = vmatpush2.msra.mxu0 0.0
    %113 = vmatprep.subr.mxu0 0.0
    %114 = vmatpush2.msra.mxu0 0.0
    %115 = vmatprep.subr.mxu0 0.0
    %116 = vmatpush2.msra.mxu0 0.0
    %117 = vmatprep.subr.mxu0 0.0
    %118 = vmatpush2.msra.mxu0 0.0
    %119 = vmatprep.subr.mxu0 0.0
    %120 = vmatpush2.msra.mxu0 0.0
    %121 = vmatprep.subr.mxu0 0.0
    %122 = vmatpush2.msra.mxu0 0.0
    %123 = vmatprep.subr.mxu0 0.0
    %124 = vmatpush2.msra.mxu0 0.0
    %125 = vmatprep.subr.mxu0 0.0
    %126 = vmatpush2.msra.mxu0 0.0
    %127 = vmatprep.subr.mxu0 0.0
    %128 = vmatpush2.msra.mxu0 0.0
    %129 = vmatprep.mubr.f32.mxu0 0.0
    %130 = vmatmul.mubr.f32.gmra.mxu0 %v41
    %v131 = vpop.f32.mrf.mxu0
    %v132 = vadd.f32 %v63, %v131
    %v133 = vpop.f32.mrf.mxu0
    %134 = vdwg.mxu0
    %vm135 = vcmp.ge.f32.partialorder %v132, 0.0
    %v136 = vmul.f32 %v132, 0.01
    %v137 = vsel %vm135, %v132, %v136
    %138 = vst [vmem:[#allocation7] sm:$0xff] %v137
    // Predicated region
    $region22: #{tpu_custom_call.1} parent=1 // pred_check
      _
    $region23: #{tpu_custom_call.1} parent=1 // pred_check_branch
      %140 = sbr.rel (0) target = $region25
    $region24: #{tpu_custom_call.1} parent=1 // pred_region
      %s142 = ssub.s32 128, 128
      %143 = vsyncadd [#allocation4], %s142
      %s145 = sshll.u32 [#allocation7], 4
      %s146 = int_to_ptr.vmem [resolvable:$true] %s145
      %148 = dma.vmem_to_hbm [thread:$0]  %s146, 128, %s3, [#allocation4]
    $region25: #{tpu_custom_call.1} parent=1 // pred_fallthru
      _
    // Predicated region
    $region26: #{tpu_custom_call.1} parent=1 // pred_check
      _
    $region27: #{tpu_custom_call.1} parent=1 // pred_check_branch
      %150 = sbr.rel (0) target = $region29
    $region28: #{tpu_custom_call.1} parent=1 // pred_region
      %151 = dma.done [#allocation4], 128
    $region29: #{tpu_custom_call.1} parent=1 // pred_fallthru
      _
    %152 = vsyncpa [#allocation3], 1
    %153 = vsyncpa [#allocation6], 1
    %154 = vsyncpa [#allocation4], 1

</llo_original>
